<compile_context>
chip_gen: v7x
topology: tpu7x:2x2x1
jax: 0.10.0
libtpu: 0.0.40
codegen_flags: <defaults>
</compile_context>

<pallas_src>
import functools
import math

import jax
import jax.numpy as jnp
from jax.experimental import pallas as pl
from jax.experimental.pallas import tpu as pltpu


# ----------------------------------------------------------------------------
# Fused kernel: remapper (Linear w/ folded bias + LeakyReLU) + all FPN stages.
# ----------------------------------------------------------------------------
def _fused_kernel(emb_ref, w_ref, t_ref, bias_ref, o_ref, z_scr, *, B, C, HW):
    # ONE remapper matmul for all channels: (B, D+1) @ (D+1, C*HW) -> (B, C*HW)
    z = jnp.dot(emb_ref[...], w_ref[...], preferred_element_type=jnp.float32)
    z = jnp.maximum(z, 0.01 * z)                       # LeakyReLU(0.01)

    # Relayout (B, C*HW) -> (C*B, HW) via VMEM scratch, rows ordered (c, b).
    for c in range(C):                                 # C is tiny, static unroll
        z_scr[c * B:(c + 1) * B, :] = z[:, c * HW:(c + 1) * HW]

    # ONE FPN matmul for all stages/channels/batch rows + one bias add +
    # one lane/sublane-dense full-slab store: (C*B, HW) @ (HW, Qpad).
    o_ref[...] = (
        jnp.dot(z_scr[...], t_ref[...], preferred_element_type=jnp.float32)
        + bias_ref[...]
    )


def fused_text_fpn(emb_aug, w_aug, t_pad, bias_pad, *, B, C, HW):
    """emb_aug (B, D+1) with trailing ones column, w_aug (D+1, C*HW) with the
    remapper bias folded into the last row, t_pad (HW, Qpad), bias_pad
    (1, Qpad).  Returns (C*B, Qpad) with rows ordered (c, b)."""
    Qp = t_pad.shape[1]
    vmem = pl.BlockSpec(memory_space=pltpu.MemorySpace.VMEM)
    kernel = functools.partial(_fused_kernel, B=B, C=C, HW=HW)
    return pl.pallas_call(
        kernel,
        out_shape=jax.ShapeDtypeStruct((C * B, Qp), jnp.float32),
        in_specs=[vmem, vmem, vmem, vmem],
        out_specs=vmem,
        scratch_shapes=[pltpu.VMEM((C * B, HW), jnp.float32)],
    )(emb_aug, w_aug, t_pad, bias_pad)


# ----------------------------------------------------------------------------
# Host-side (one-time) construction of the per-stage linear operators.
# ----------------------------------------------------------------------------
def interp_matrix(out_size, in_size):
    """1-D linear interpolation matrix matching F.interpolate(mode='bilinear',
    align_corners=False) along one axis."""
    scale = in_size / out_size
    i = jnp.arange(out_size, dtype=jnp.float32)
    src = (i + 0.5) * scale - 0.5
    src = jnp.maximum(src, 0.0)                      # PyTorch clamps negatives
    x0 = jnp.floor(src).astype(jnp.int32)
    x0 = jnp.minimum(x0, in_size - 1)
    x1 = jnp.minimum(x0 + 1, in_size - 1)
    lam = src - x0.astype(jnp.float32)
    rows = jnp.arange(out_size)
    A = jnp.zeros((out_size, in_size), jnp.float32)
    A = A.at[rows, x0].add(1.0 - lam)
    A = A.at[rows, x1].add(lam)
    return A


def repeat_matrix(in_size, s):
    """R of shape (in_size*s, in_size) with R[i, i//s] = 1."""
    rows = jnp.arange(in_size * s)
    return jnp.zeros((in_size * s, in_size), jnp.float32).at[rows, rows // s].set(1.0)


def build_stage_operator(H, W, Ho, Wo, conv=None):
    """Return (T, bias_flat) with  vec(out) = vec(x) @ T + bias_flat  for one
    FPN stage (ConvTranspose2d(stride==kernel) [optional] + bilinear resize)."""
    if conv is not None:
        s, kw, kb = conv
        lh = repeat_matrix(H, s)                  # (H*s, H)
        rwT = repeat_matrix(W, s).T               # (W, W*s)
        m = jnp.tile(kw, (H, W))                  # (H*s, W*s): M[i,j]=K[i%s,j%s]
        ah = interp_matrix(Ho, H * s)             # (Ho, H*s)
        awT = interp_matrix(Wo, W * s).T          # (W*s, Wo)
        lin = lambda x: ah @ ((lh @ x @ rwT) * m) @ awT
        bias_img = kb * (ah @ jnp.ones((H * s, W * s), jnp.float32) @ awT)
    else:
        ah = interp_matrix(Ho, H)
        awT = interp_matrix(Wo, W).T
        lin = lambda x: ah @ x @ awT
        bias_img = jnp.zeros((Ho, Wo), jnp.float32)
    basis = jnp.eye(H * W, dtype=jnp.float32).reshape(H * W, H, W)
    T = jax.vmap(lambda e: lin(e).reshape(-1))(basis)      # (H*W, Ho*Wo)
    return T, bias_img.reshape(-1)


# ----------------------------------------------------------------------------
# Pure-JAX chained reference (original per-stage formulation) for correctness.
# ----------------------------------------------------------------------------
def ref_stage(x_flat, H, W, Ho, Wo, conv):
    if conv is not None:
        s, kw, kb = conv
        lh = repeat_matrix(H, s)
        rwT = repeat_matrix(W, s).T
        m = jnp.tile(kw, (H, W))
        ah = interp_matrix(Ho, H * s)
        awT = interp_matrix(Wo, W * s).T
        u = jnp.einsum("ab,nbc,cd->nad", lh, x_flat, rwT) * m[None] + kb
        return jnp.einsum("ea,nad,df->nef", ah, u, awT)
    ah = interp_matrix(Ho, H)
    awT = interp_matrix(Wo, W).T
    return jnp.einsum("ea,nad,df->nef", ah, x_flat, awT)


# ----------------------------------------------------------------------------
if __name__ == "__main__":
    key = jax.random.PRNGKey(0)

    # Small shapes consistent with the module
    B = 2
    C, H, W = 4, 8, 8
    expected_output_shape = (C, H, W)          # smallest vision feature shape
    D_text = 384                               # SentenceTransformer output dim
    fpn_keys = ["p2", "p3", "p4"]              # last key has no conv-transpose
    num_fpn = len(fpn_keys)
    feature_shapes = {
        "p2": (B, C, 28, 28),
        "p3": (B, C, 14, 14),
        "p4": (B, C, 7, 7),
    }
    P = math.prod(expected_output_shape)
    HW = H * W

    ks = jax.random.split(key, 5)
    # Synthetic deterministic text embeddings (stand-in for SentenceTransformer)
    emb = jax.random.normal(ks[0], (B, D_text), jnp.float32)

    # remapper parameters: Linear(384 -> P)
    w_remap = jax.random.normal(ks[1], (D_text, P), jnp.float32) / math.sqrt(D_text)
    b_remap = jax.random.normal(ks[2], (P,), jnp.float32) * 0.01

    # ConvTranspose2d(1,1,k=s,stride=s) parameters for all but the last key
    conv_params = {}
    for i, k in enumerate(fpn_keys[:-1]):
        s = 2 ** (num_fpn - i - 1)
        kw = jax.random.normal(jax.random.fold_in(ks[3], i), (s, s), jnp.float32) / s
        kb = jax.random.normal(jax.random.fold_in(ks[4], i), (), jnp.float32) * 0.01
        conv_params[k] = (s, kw, kb)

    # ---- host-side one-time operator construction (f32-exact matmuls) ----
    with jax.default_matmul_precision("highest"):
        t_list, bias_list, sizes = [], [], []
        for k in fpn_keys:
            Ho, Wo = feature_shapes[k][-2:]
            T_k, bias_k = build_stage_operator(H, W, Ho, Wo, conv_params.get(k))
            t_list.append(T_k)
            bias_list.append(bias_k)
            sizes.append((Ho, Wo))
        t_all = jnp.concatenate(t_list, axis=1)                   # (HW, Q)
        bias_all = jnp.concatenate(bias_list)[None, :]            # (1, Q)
    Q = t_all.shape[1]                                            # 1029
    Qp = pl.cdiv(Q, 128) * 128                                    # 1152, lane-dense

    # ---- operand prep (layout plumbing only) ----
    # fold remapper bias: emb gets a trailing ones column, w gets a bias row
    emb_aug = jnp.concatenate([emb, jnp.ones((B, 1), jnp.float32)], axis=1)
    w_aug = jnp.concatenate([w_remap, b_remap[None, :]], axis=0)  # (D+1, C*HW)
    # pad Q to a multiple of 128 so the kernel's single output store is dense
    t_pad = jnp.pad(t_all, ((0, 0), (0, Qp - Q)))
    bias_pad = jnp.pad(bias_all, ((0, 0), (0, Qp - Q)))

    # ---- forward: ONE fused Pallas kernel, no grid ----
    out = fused_text_fpn(emb_aug, w_aug, t_pad, bias_pad, B=B, C=C, HW=HW)
    out = out.reshape(C, B, Qp).transpose(1, 0, 2)[:, :, :Q]      # (B, C, Q)

    fpn_features = {}
    off = 0
    for k, (Ho, Wo) in zip(fpn_keys, sizes):
        fpn_features[k] = out[:, :, off:off + Ho * Wo].reshape(B, C, Ho, Wo)
        off += Ho * Wo
    jax.block_until_ready(fpn_features)

    # ---- correctness: pure-JAX chained reference (original formulation) ----
    with jax.default_matmul_precision("highest"):
        z_ref = emb @ w_remap + b_remap[None, :]
        z_ref = jnp.where(z_ref >= 0.0, z_ref, 0.01 * z_ref)
        x_flat = z_ref.reshape(B * C, H, W)

        off = 0
        for k, (Ho, Wo) in zip(fpn_keys, sizes):
            y_ref = ref_stage(x_flat, H, W, Ho, Wo,
                              conv_params.get(k)).reshape(B, C, Ho, Wo)

            # (a) precomputed operator matches the chained formulation (exact f32)
            T_k = t_all[:, off:off + Ho * Wo]
            b_k = bias_all[:, off:off + Ho * Wo]
            y_op = (x_flat.reshape(B * C, HW) @ T_k + b_k).reshape(B, C, Ho, Wo)
            assert jnp.allclose(y_op, y_ref, rtol=1e-5, atol=1e-4), f"operator {k}"

            # (b) fused Pallas kernel matches the reference end-to-end.
            # Tolerance sized to absorb MXU default-precision (bf16-pass)
            # rounding of the K=385 contraction; real plumbing bugs produce
            # O(0.1..1) errors, far above this.
            assert fpn_features[k].shape == feature_shapes[k]
            assert jnp.allclose(fpn_features[k], y_ref, rtol=2e-2, atol=2e-2), \
                f"kernel mismatch for {k}"
            off += Ho * Wo

    print("KERNEL_OK")
</pallas_src>

<mosaic_0001>
module attributes {stable_mosaic.version = 11 : i64} {
  func.func @_fused_kernel(%arg0: memref<2x385xf32, #tpu.memory_space<vmem>>, %arg1: memref<385x256xf32, #tpu.memory_space<vmem>>, %arg2: memref<64x1152xf32, #tpu.memory_space<vmem>>, %arg3: memref<1x1152xf32, #tpu.memory_space<vmem>>, %arg4: memref<8x1152xf32, #tpu.memory_space<vmem>>, %arg5: memref<8x64xf32, #tpu.memory_space<vmem>>) attributes {dimension_semantics = [], scalar_prefetch = 0 : i64, scratch_operands = 1 : i64, tpu.core_type = #tpu.core_type<tc>} {
    %c0 = arith.constant 0 : index
    %c0_0 = arith.constant 0 : index
    %0 = vector.load %arg0[%c0, %c0_0] : memref<2x385xf32, #tpu.memory_space<vmem>>, vector<2x385xf32>
    %c0_1 = arith.constant 0 : index
    %c0_2 = arith.constant 0 : index
    %1 = vector.load %arg1[%c0_1, %c0_2] : memref<385x256xf32, #tpu.memory_space<vmem>>, vector<385x256xf32>
    %cst = arith.constant dense<0.000000e+00> : vector<2x256xf32>
    %2 = tpu.matmul %0, %1, %cst {dimension_numbers = #tpu.dot_dimension_numbers<[1], [0], [0], [1], [0, 0, 1, 1], [], []>} : vector<2x385xf32>, vector<385x256xf32>, vector<2x256xf32> -> vector<2x256xf32>
    %cst_3 = arith.constant 0.00999999977 : f32
    %3 = vector.broadcast %cst_3 : f32 to vector<2x256xf32>
    %4 = arith.mulf %3, %2 : vector<2x256xf32>
    %5 = arith.maximumf %2, %4 : vector<2x256xf32>
    %6 = vector.extract_strided_slice %5 {offsets = [0, 0], sizes = [2, 64], strides = [1, 1]} : vector<2x256xf32> to vector<2x64xf32>
    %c0_4 = arith.constant 0 : index
    %c0_5 = arith.constant 0 : index
    %7 = vector.load %arg5[%c0_4, %c0_5] : memref<8x64xf32, #tpu.memory_space<vmem>>, vector<2x64xf32>
    tpu.vector_store %arg5[%c0_4, %c0_5], %6 {strides = array<i32>} : memref<8x64xf32, #tpu.memory_space<vmem>>, vector<2x64xf32>,
    %8 = vector.extract_strided_slice %5 {offsets = [0, 64], sizes = [2, 64], strides = [1, 1]} : vector<2x256xf32> to vector<2x64xf32>
    %c2 = arith.constant 2 : index
    %c0_6 = arith.constant 0 : index
    %9 = vector.load %arg5[%c2, %c0_6] : memref<8x64xf32, #tpu.memory_space<vmem>>, vector<2x64xf32>
    tpu.vector_store %arg5[%c2, %c0_6], %8 {strides = array<i32>} : memref<8x64xf32, #tpu.memory_space<vmem>>, vector<2x64xf32>,
    %10 = vector.extract_strided_slice %5 {offsets = [0, 128], sizes = [2, 64], strides = [1, 1]} : vector<2x256xf32> to vector<2x64xf32>
    %c4 = arith.constant 4 : index
    %c0_7 = arith.constant 0 : index
    %11 = vector.load %arg5[%c4, %c0_7] : memref<8x64xf32, #tpu.memory_space<vmem>>, vector<2x64xf32>
    tpu.vector_store %arg5[%c4, %c0_7], %10 {strides = array<i32>} : memref<8x64xf32, #tpu.memory_space<vmem>>, vector<2x64xf32>,
    %12 = vector.extract_strided_slice %5 {offsets = [0, 192], sizes = [2, 64], strides = [1, 1]} : vector<2x256xf32> to vector<2x64xf32>
    %c6 = arith.constant 6 : index
    %c0_8 = arith.constant 0 : index
    %13 = vector.load %arg5[%c6, %c0_8] : memref<8x64xf32, #tpu.memory_space<vmem>>, vector<2x64xf32>
    tpu.vector_store %arg5[%c6, %c0_8], %12 {strides = array<i32>} : memref<8x64xf32, #tpu.memory_space<vmem>>, vector<2x64xf32>,
    %c0_9 = arith.constant 0 : index
    %c0_10 = arith.constant 0 : index
    %14 = vector.load %arg5[%c0_9, %c0_10] : memref<8x64xf32, #tpu.memory_space<vmem>>, vector<8x64xf32>
    %c0_11 = arith.constant 0 : index
    %c0_12 = arith.constant 0 : index
    %15 = vector.load %arg2[%c0_11, %c0_12] : memref<64x1152xf32, #tpu.memory_space<vmem>>, vector<64x1152xf32>
    %cst_13 = arith.constant dense<0.000000e+00> : vector<8x1152xf32>
    %16 = tpu.matmul %14, %15, %cst_13 {dimension_numbers = #tpu.dot_dimension_numbers<[1], [0], [0], [1], [0, 0, 1, 1], [], []>} : vector<8x64xf32>, vector<64x1152xf32>, vector<8x1152xf32> -> vector<8x1152xf32>
    %c0_14 = arith.constant 0 : index
    %c0_15 = arith.constant 0 : index
    %17 = vector.load %arg3[%c0_14, %c0_15] : memref<1x1152xf32, #tpu.memory_space<vmem>>, vector<1x1152xf32>
    %18 = vector.broadcast %17 : vector<1x1152xf32> to vector<8x1152xf32>
    %19 = arith.addf %16, %18 : vector<8x1152xf32>
    %c0_16 = arith.constant 0 : index
    %c0_17 = arith.constant 0 : index
    %20 = vector.load %arg4[%c0_16, %c0_17] : memref<8x1152xf32, #tpu.memory_space<vmem>>, vector<8x1152xf32>
    tpu.vector_store %arg4[%c0_16, %c0_17], %19 {strides = array<i32>} : memref<8x1152xf32, #tpu.memory_space<vmem>>, vector<8x1152xf32>,
    return
  }
}

</mosaic_0001>

<llo_original>
// kernel: tpu_custom_call.1
$region0: #{tpu_custom_call.1}
  #allocation0 [shape = 'u32[]', space=smem, size = 0x4, offset = 0x4, fixed_abs, tag = 'smem constant byte address 0x4 - core index']
  #allocation1 [shape = 'u32[144,128]{1,0:T(1,128)}', space=vmem, size = 0x12000, scoped, tag = 'internal scratch']
  #allocation2 [shape = 'f32[8,64]{1,0:T(8,128)}', space=vmem, size = 0x1000, scoped, tag = 'scratch operand']
  %s0 = inlined_call_operand.hbm [shape: f32[2,385], index: 0, kind: input, shape index: {}]
  %s1 = inlined_call_operand.hbm [shape: f32[385,256], index: 1, kind: input, shape index: {}]
  %s2 = inlined_call_operand.hbm [shape: f32[64,1152], index: 2, kind: input, shape index: {}]
  %s3 = inlined_call_operand.vmem [shape: f32[1,1152], index: 3, kind: input, shape index: {}]
  %s4 = inlined_call_operand.hbm [shape: f32[8,1152], index: 4, kind: output, shape index: {}]
  %s5 = sld [smem:[#allocation0]]
  $region38: #{tpu_custom_call.1} parent=0
    _
  %s7 = ssub.s32 1, %s5
  %s8 = scalar_select 0, %s7, %s5
  $region1: #{tpu_custom_call.1} parent=0
    #allocation3 [shape = 'u8[4096]{0}', space=vmem, size = 0x1000, scoped, tag = 'input window, operand 0, single buffered']
    #allocation4 [shape = 's32[1]{0}', space=sflag, size = 0x4, scoped, tag = 'scoped memory for tpu_custom_call.1']
    #allocation5 [shape = 's32[1]{0}', space=sflag, size = 0x4, scoped, tag = 'scoped memory for tpu_custom_call.1']
    #allocation6 [shape = 'u8[401408]{0}', space=vmem, size = 0x62000, scoped, tag = 'input window, operand 1, single buffered']
    #allocation7 [shape = 's32[1]{0}', space=sflag, size = 0x4, scoped, tag = 'scoped memory for tpu_custom_call.1']
    #allocation8 [shape = 'u8[294912]{0}', space=vmem, size = 0x48000, scoped, tag = 'input window, operand 2, single buffered']
    #allocation9 [shape = 'u8[36864]{0}', space=vmem, size = 0x9000, scoped, tag = 'output window, operand 0, single buffered']
    %9 = vsyncpa [#allocation4], 0
    %10 = vsyncpa [#allocation7], 0
    %11 = vsyncpa [#allocation5], 0
    // Predicated region
    $region2: #{tpu_custom_call.1} parent=1 // pred_check
      _
    $region3: #{tpu_custom_call.1} parent=1 // pred_check_branch
      %13 = sbr.rel (0) target = $region5
    $region4: #{tpu_custom_call.1} parent=1 // pred_region
      %s15 = ssub.s32 128, 128
      %16 = vsyncadd [#allocation4], %s15
      %s18 = sshll.u32 [#allocation3], 4
      %s19 = int_to_ptr.vmem [resolvable:$true] %s18
      %21 = dma.hbm_to_vmem [thread:$0]  %s0, 128, %s19, [#allocation4]
    $region5: #{tpu_custom_call.1} parent=1 // pred_fallthru
      _
    // Predicated region
    $region6: #{tpu_custom_call.1} parent=1 // pred_check
      _
    $region7: #{tpu_custom_call.1} parent=1 // pred_check_branch
      %23 = sbr.rel (0) target = $region9
    $region8: #{tpu_custom_call.1} parent=1 // pred_region
      %s25 = ssub.s32 12544, 12544
      %26 = vsyncadd [#allocation7], %s25
      %s27 = sshll.u32 [#allocation6], 4
      %s28 = int_to_ptr.vmem [resolvable:$true] %s27
      %33 = dma.hbm_to_vmem [thread:$0]  %s1, 12544, %s28, [#allocation7], 256, 256, 16
    $region9: #{tpu_custom_call.1} parent=1 // pred_fallthru
      _
    // Predicated region
    $region10: #{tpu_custom_call.1} parent=1 // pred_check
      _
    $region11: #{tpu_custom_call.1} parent=1 // pred_check_branch
      %35 = sbr.rel (0) target = $region13
    $region12: #{tpu_custom_call.1} parent=1 // pred_region
      %s37 = ssub.s32 9216, 9216
      %38 = vsyncadd [#allocation7], %s37
      %s39 = sshll.u32 [#allocation8], 4
      %s40 = int_to_ptr.vmem [resolvable:$true] %s39
      %45 = dma.hbm_to_vmem [thread:$0]  %s2, 9216, %s40, [#allocation7], 1152, 1152, 72
    $region13: #{tpu_custom_call.1} parent=1 // pred_fallthru
      _
    // Predicated region
    $region14: #{tpu_custom_call.1} parent=1 // pred_check
      _
    $region15: #{tpu_custom_call.1} parent=1 // pred_check_branch
      %47 = sbr.rel (0) target = $region17
    $region16: #{tpu_custom_call.1} parent=1 // pred_region
      _
    $region17: #{tpu_custom_call.1} parent=1 // pred_fallthru
      _
    // Predicated region
    $region18: #{tpu_custom_call.1} parent=1 // pred_check
      _
    $region19: #{tpu_custom_call.1} parent=1 // pred_check_branch
      %49 = sbr.rel (0) target = $region21
    $region20: #{tpu_custom_call.1} parent=1 // pred_region
      %50 = dma.done [#allocation4], 128
    $region21: #{tpu_custom_call.1} parent=1 // pred_fallthru
      _
    // Predicated region
    $region22: #{tpu_custom_call.1} parent=1 // pred_check
      _
    $region23: #{tpu_custom_call.1} parent=1 // pred_check_branch
      %52 = sbr.rel (0) target = $region25
    $region24: #{tpu_custom_call.1} parent=1 // pred_region
      %53 = dma.done [#allocation7], 12544
    $region25: #{tpu_custom_call.1} parent=1 // pred_fallthru
      _
    // Predicated region
    $region26: #{tpu_custom_call.1} parent=1 // pred_check
      _
    $region27: #{tpu_custom_call.1} parent=1 // pred_check_branch
      %55 = sbr.rel (0) target = $region29
    $region28: #{tpu_custom_call.1} parent=1 // pred_region
      %56 = dma.done [#allocation7], 9216
    $region29: #{tpu_custom_call.1} parent=1 // pred_fallthru
      _
    %v57 = vld [vmem:[#allocation3] sm:$0xff]
    %v58 = vld [vmem:[#allocation6] sm:$0xff]
    %v59 = vld [vmem:[#allocation6 + $0x8] sm:$0xff]
    %v60 = vld [vmem:[#allocation6 + $0x10] sm:$0xff]
    %v61 = vld [vmem:[#allocation6 + $0x18] sm:$0xff]
    %v62 = vld [vmem:[#allocation6 + $0x20] sm:$0xff]
    %v63 = vld [vmem:[#allocation6 + $0x28] sm:$0xff]
    %v64 = vld [vmem:[#allocation6 + $0x30] sm:$0xff]
    %v65 = vld [vmem:[#allocation6 + $0x38] sm:$0xff]
    %v66 = vld [vmem:[#allocation6 + $0x40] sm:$0xff]
    %v67 = vld [vmem:[#allocation6 + $0x48] sm:$0xff]
    %v68 = vld [vmem:[#allocation6 + $0x50] sm:$0xff]
    %v69 = vld [vmem:[#allocation6 + $0x58] sm:$0xff]
    %v70 = vld [vmem:[#allocation6 + $0x60] sm:$0xff]
    %v71 = vld [vmem:[#allocation6 + $0x68] sm:$0xff]
    %v72 = vld [vmem:[#allocation6 + $0x70] sm:$0xff]
    %v73 = vld [vmem:[#allocation6 + $0x78] sm:$0xff]
    %v74 = vld [vmem:[#allocation6 + $0x80] sm:$0xff]
    %v75 = vld [vmem:[#allocation6 + $0x88] sm:$0xff]
    %v76 = vld [vmem:[#allocation6 + $0x90] sm:$0xff]
    %v77 = vld [vmem:[#allocation6 + $0x98] sm:$0xff]
    %v78 = vld [vmem:[#allocation6 + $0xa0] sm:$0xff]
    %v79 = vld [vmem:[#allocation6 + $0xa8] sm:$0xff]
    %v80 = vld [vmem:[#allocation6 + $0xb0] sm:$0xff]
    %v81 = vld [vmem:[#allocation6 + $0xb8] sm:$0xff]
    %v82 = vld [vmem:[#allocation6 + $0xc0] sm:$0xff]
    %v83 = vld [vmem:[#allocation6 + $0xc8] sm:$0xff]
    %v84 = vld [vmem:[#allocation6 + $0xd0] sm:$0xff]
    %v85 = vld [vmem:[#allocation6 + $0xd8] sm:$0xff]
    %v86 = vld [vmem:[#allocation6 + $0xe0] sm:$0xff]
    %v87 = vld [vmem:[#allocation6 + $0xe8] sm:$0xff]
    %v88 = vld [vmem:[#allocation6 + $0xf0] sm:$0xff]
    %v89 = vld [vmem:[#allocation6 + $0xf8] sm:$0xff]
    %v90 = vld [vmem:[#allocation6 + $0x100] sm:$0xff]
    %v91 = vld [vmem:[#allocation6 + $0x108] sm:$0xff]
    %v92 = vld [vmem:[#allocation6 + $0x110] sm:$0xff]
    %v93 = vld [vmem:[#allocation6 + $0x118] sm:$0xff]
    %v94 = vld [vmem:[#allocation6 + $0x120] sm:$0xff]
    %v95 = vld [vmem:[#allocation6 + $0x128] sm:$0xff]
    %v96 = vld [vmem:[#allocation6 + $0x130] sm:$0xff]
    %v97 = vld [vmem:[#allocation6 + $0x138] sm:$0xff]
    %v98 = vld [vmem:[#allocation6 + $0x140] sm:$0xff]
    %v99 = vld [vmem:[#allocation6 + $0x148] sm:$0xff]
    %v100 = vld [vmem:[#allocation6 + $0x150] sm:$0xff]
    %v101 = vld [vmem:[#allocation6 + $0x158] sm:$0xff]
    %v102 = vld [vmem:[#allocation6 + $0x160] sm:$0xff]
    %v103 = vld [vmem:[#allocation6 + $0x168] sm:$0xff]
    %v104 = vld [vmem:[#allocation6 + $0x170] sm:$0xff]
    %v105 = vld [vmem:[#allocation6 + $0x178] sm:$0xff]
    %v106 = vld [vmem:[#allocation6 + $0x180] sm:$0xff]
    %v107 = vld [vmem:[#allocation6 + $0x188] sm:$0xff]
    %v108 = vld [vmem:[#allocation6 + $0x190] sm:$0xff]
    %v109 = vld [vmem:[#allocation6 + $0x198] sm:$0xff]
    %v110 = vld [vmem:[#allocation6 + $0x1a0] sm:$0xff]
    %v111 = vld [vmem:[#allocation6 + $0x1a8] sm:$0xff]
    %v112 = vld [vmem:[#allocation6 + $0x1b0] sm:$0xff]
    %v113 = vld [vmem:[#allocation6 + $0x1b8] sm:$0xff]
    %v114 = vld [vmem:[#allocation6 + $0x1c0] sm:$0xff]
    %v115 = vld [vmem:[#allocation6 + $0x1c8] sm:$0xff]
    %v116 = vld [vmem:[#allocation6 + $0x1d0] sm:$0xff]
    %v117 = vld [vmem:[#allocation6 + $0x1d8] sm:$0xff]
    %v118 = vld [vmem:[#allocation6 + $0x1e0] sm:$0xff]
    %v119 = vld [vmem:[#allocation6 + $0x1e8] sm:$0xff]
    %v120 = vld [vmem:[#allocation6 + $0x1f0] sm:$0xff]
    %v121 = vld [vmem:[#allocation6 + $0x1f8] sm:$0xff]
    %v122 = vld [vmem:[#allocation6 + $0x200] sm:$0xff]
    %v123 = vld [vmem:[#allocation6 + $0x208] sm:$0xff]
    %v124 = vld [vmem:[#allocation6 + $0x210] sm:$0xff]
    %v125 = vld [vmem:[#allocation6 + $0x218] sm:$0xff]
    %v126 = vld [vmem:[#allocation6 + $0x220] sm:$0xff]
    %v127 = vld [vmem:[#allocation6 + $0x228] sm:$0xff]
    %v128 = vld [vmem:[#allocation6 + $0x230] sm:$0xff]
    %v129 = vld [vmem:[#allocation6 + $0x238] sm:$0xff]
    %v130 = vld [vmem:[#allocation6 + $0x240] sm:$0xff]
    %v131 = vld [vmem:[#allocation6 + $0x248] sm:$0xff]
    %v132 = vld [vmem:[#allocation6 + $0x250] sm:$0xff]
    %v133 = vld [vmem:[#allocation6 + $0x258] sm:$0xff]
    %v134 = vld [vmem:[#allocation6 + $0x260] sm:$0xff]
    %v135 = vld [vmem:[#allocation6 + $0x268] sm:$0xff]
    %v136 = vld [vmem:[#allocation6 + $0x270] sm:$0xff]
    %v137 = vld [vmem:[#allocation6 + $0x278] sm:$0xff]
    %v138 = vld [vmem:[#allocation6 + $0x280] sm:$0xff]
    %v139 = vld [vmem:[#allocation6 + $0x288] sm:$0xff]
    %v140 = vld [vmem:[#allocation6 + $0x290] sm:$0xff]
    %v141 = vld [vmem:[#allocation6 + $0x298] sm:$0xff]
    %v142 = vld [vmem:[#allocation6 + $0x2a0] sm:$0xff]
    %v143 = vld [vmem:[#allocation6 + $0x2a8] sm:$0xff]
    %v144 = vld [vmem:[#allocation6 + $0x2b0] sm:$0xff]
    %v145 = vld [vmem:[#allocation6 + $0x2b8] sm:$0xff]
    %v146 = vld [vmem:[#allocation6 + $0x2c0] sm:$0xff]
    %v147 = vld [vmem:[#allocation6 + $0x2c8] sm:$0xff]
    %v148 = vld [vmem:[#allocation6 + $0x2d0] sm:$0xff]
    %v149 = vld [vmem:[#allocation6 + $0x2d8] sm:$0xff]
    %v150 = vld [vmem:[#allocation6 + $0x2e0] sm:$0xff]
    %v151 = vld [vmem:[#allocation6 + $0x2e8] sm:$0xff]
    %v152 = vld [vmem:[#allocation6 + $0x2f0] sm:$0xff]
    %v153 = vld [vmem:[#allocation6 + $0x2f8] sm:$0xff]
    %v154 = vld [vmem:[#allocation6 + $0x300] sm:$0x1]
    %v155 = vld [vmem:[#allocation6 + $0x308] sm:$0x1]
    %v157 = vcombine.high %v57, %v57
    %v159 = vunpack.c.l.s4 1983009808
    %v160 = vunpack.c.0.s8 %v159
    %v161 = vlaneseq
    %v162 = vshrl.u32 %v161, 7
    %v163 = vsub.s32 %v160, %v162
    %v164 = vrot.slane %v57, %v163
    %v166 = vunpack.c.l.s4 1983009808
    %v167 = vunpack.c.0.s8 %v166
    %v168 = vlaneseq
    %v169 = vshrl.u32 %v168, 7
    %v170 = vsub.s32 %v167, %v169
    %v171 = vrot.slane %v157, %v170
    %v172 = vcombine.high %v164, %v164
    %v173 = vcombine.high %v171, %v171
    %vm177 = vcmask 7168
    %v178 = vsel %vm177, %v173, 0
    %vm180 = vcmask 1040384
    %v182 = vsel %vm180, %v154, 0
    %v185 = vsel %vm180, %v155, 0
    %187 = vmatprep.subr.mxu0 %v59
    %188 = vmatpush1.msra.mxu0 %v58
    %189 = vmatprep.subr.mxu0 %v61
    %190 = vmatpush1.msra.mxu0 %v60
    %191 = vmatprep.subr.mxu0 %v63
    %192 = vmatpush1.msra.mxu0 %v62
    %193 = vmatprep.subr.mxu0 %v65
    %194 = vmatpush1.msra.mxu0 %v64
    %195 = vmatprep.subr.mxu0 %v67
    %196 = vmatpush1.msra.mxu0 %v66
    %197 = vmatprep.subr.mxu0 %v69
    %198 = vmatpush1.msra.mxu0 %v68
    %199 = vmatprep.subr.mxu0 %v71
    %200 = vmatpush1.msra.mxu0 %v70
    %201 = vmatprep.subr.mxu0 %v73
    %202 = vmatpush1.msra.mxu0 %v72
    %203 = vmatprep.subr.mxu0 %v75
    %204 = vmatpush1.msra.mxu0 %v74
    %205 = vmatprep.subr.mxu0 %v77
    %206 = vmatpush1.msra.mxu0 %v76
    %207 = vmatprep.subr.mxu0 %v79
    %208 = vmatpush1.msra.mxu0 %v78
    %209 = vmatprep.subr.mxu0 %v81
    %210 = vmatpush1.msra.mxu0 %v80
    %211 = vmatprep.subr.mxu0 %v83
    %212 = vmatpush1.msra.mxu0 %v82
    %213 = vmatprep.subr.mxu0 %v85
    %214 = vmatpush1.msra.mxu0 %v84
    %215 = vmatprep.subr.mxu0 %v87
    %216 = vmatpush1.msra.mxu0 %v86
    %217 = vmatprep.subr.mxu0 %v89
    %218 = vmatpush1.msra.mxu0 %v88
    %219 = vmatprep.subr.mxu0 %v91
    %220 = vmatpush1.msra.mxu0 %v90
    %221 = vmatprep.subr.mxu0 %v93
    %222 = vmatpush1.msra.mxu0 %v92
    %223 = vmatprep.subr.mxu0 %v95
    %224 = vmatpush1.msra.mxu0 %v94
    %225 = vmatprep.subr.mxu0 %v97
    %226 = vmatpush1.msra.mxu0 %v96
    %227 = vmatprep.subr.mxu0 %v99
    %228 = vmatpush1.msra.mxu0 %v98
    %229 = vmatprep.subr.mxu0 %v101
    %230 = vmatpush1.msra.mxu0 %v100
    %231 = vmatprep.subr.mxu0 %v103
    %232 = vmatpush1.msra.mxu0 %v102
    %233 = vmatprep.subr.mxu0 %v105
    %234 = vmatpush1.msra.mxu0 %v104
    %235 = vmatprep.subr.mxu0 %v107
    %236 = vmatpush1.msra.mxu0 %v106
    %237 = vmatprep.subr.mxu0 %v109
    %238 = vmatpush1.msra.mxu0 %v108
    %239 = vmatprep.subr.mxu0 %v111
    %240 = vmatpush1.msra.mxu0 %v110
    %241 = vmatprep.subr.mxu0 %v113
    %242 = vmatpush1.msra.mxu0 %v112
    %243 = vmatprep.subr.mxu0 %v115
    %244 = vmatpush1.msra.mxu0 %v114
    %245 = vmatprep.subr.mxu0 %v117
    %246 = vmatpush1.msra.mxu0 %v116
    %247 = vmatprep.subr.mxu0 %v119
    %248 = vmatpush1.msra.mxu0 %v118
    %249 = vmatprep.subr.mxu0 %v121
    %250 = vmatpush1.msra.mxu0 %v120
    %251 = vmatprep.mubr.f32.mxu0 %v172
    %252 = vmatmul.mubr.f32.gmra.mrb[0].mxu0 %v164
    %v253 = vpop.f32.mrb[0].mxu0
    %v254 = vadd.f32 0.0, %v253
    %v255 = vpop.f32.mrb[0].mxu0
    %v256 = vadd.f32 0.0, %v255
    %257 = vdwg.mxu0
    %258 = vmatprep.subr.mxu0 %v123
    %259 = vmatpush1.msra.mxu0 %v122
    %260 = vmatprep.subr.mxu0 %v125
    %261 = vmatpush1.msra.mxu0 %v124
    %262 = vmatprep.subr.mxu0 %v127
    %263 = vmatpush1.msra.mxu0 %v126
    %264 = vmatprep.subr.mxu0 %v129
    %265 = vmatpush1.msra.mxu0 %v128
    %266 = vmatprep.subr.mxu0 %v131
    %267 = vmatpush1.msra.mxu0 %v130
    %268 = vmatprep.subr.mxu0 %v133
    %269 = vmatpush1.msra.mxu0 %v132
    %270 = vmatprep.subr.mxu0 %v135
    %271 = vmatpush1.msra.mxu0 %v134
    %272 = vmatprep.subr.mxu0 %v137
    %273 = vmatpush1.msra.mxu0 %v136
    %274 = vmatprep.subr.mxu0 %v139
    %275 = vmatpush1.msra.mxu0 %v138
    %276 = vmatprep.subr.mxu0 %v141
    %277 = vmatpush1.msra.mxu0 %v140
    %278 = vmatprep.subr.mxu0 %v143
    %279 = vmatpush1.msra.mxu0 %v142
    %280 = vmatprep.subr.mxu0 %v145
    %281 = vmatpush1.msra.mxu0 %v144
    %282 = vmatprep.subr.mxu0 %v147
    %283 = vmatpush1.msra.mxu0 %v146
    %284 = vmatprep.subr.mxu0 %v149
    %285 = vmatpush1.msra.mxu0 %v148
    %286 = vmatprep.subr.mxu0 %v151
    %287 = vmatpush1.msra.mxu0 %v150
    %288 = vmatprep.subr.mxu0 %v153
    %289 = vmatpush1.msra.mxu0 %v152
    %290 = vmatprep.subr.mxu0 %v185
    %291 = vmatpush1.msra.mxu0 %v182
    %292 = vmatprep.subr.mxu0 0.0
    %293 = vmatpush1.msra.mxu0 0.0
    %294 = vmatprep.subr.mxu0 0.0
    %295 = vmatpush1.msra.mxu0 0.0
    %296 = vmatprep.subr.mxu0 0.0
    %297 = vmatpush1.msra.mxu0 0.0
    %298 = vmatprep.subr.mxu0 0.0
    %299 = vmatpush1.msra.mxu0 0.0
    %300 = vmatprep.subr.mxu0 0.0
    %301 = vmatpush1.msra.mxu0 0.0
    %302 = vmatprep.subr.mxu0 0.0
    %303 = vmatpush1.msra.mxu0 0.0
    %304 = vmatprep.subr.mxu0 0.0
    %305 = vmatpush1.msra.mxu0 0.0
    %306 = vmatprep.subr.mxu0 0.0
    %307 = vmatpush1.msra.mxu0 0.0
    %308 = vmatprep.subr.mxu0 0.0
    %309 = vmatpush1.msra.mxu0 0.0
    %310 = vmatprep.subr.mxu0 0.0
    %311 = vmatpush1.msra.mxu0 0.0
    %312 = vmatprep.subr.mxu0 0.0
    %313 = vmatpush1.msra.mxu0 0.0
    %314 = vmatprep.subr.mxu0 0.0
    %315 = vmatpush1.msra.mxu0 0.0
    %316 = vmatprep.subr.mxu0 0.0
    %317 = vmatpush1.msra.mxu0 0.0
    %318 = vmatprep.subr.mxu0 0.0
    %319 = vmatpush1.msra.mxu0 0.0
    %320 = vmatprep.subr.mxu0 0.0
    %321 = vmatpush1.msra.mxu0 0.0
    %322 = vmatprep.mubr.f32.mxu0 %v178
    %323 = vmatmul.mubr.f32.gmra.mrb[0].mxu0 %v171
    %v324 = vpop.f32.mrb[0].mxu0
    %v325 = vadd.f32 %v254, %v324
    %v326 = vpop.f32.mrb[0].mxu0
    %v327 = vadd.f32 %v256, %v326
    %328 = vdwg.mxu0
    %v329 = vmul.f32 %v325, 0.01
    %v330 = vmul.f32 %v327, 0.01
    %v331 = vmax.f32 %v325, %v329
    %v332 = vmax.f32 %v327, %v330
    %vm333 = vcmask 517120
    %334 = vst.msk [vmem:[#allocation2] sm:$0x3] %vm333, %v331
    %336 = vrot.lane.b32.xlu0 %v331, 64
    %v337 = vpop.permute.xlu0 %336
    %339 = vst.msk [vmem:[#allocation2 + $0x2] sm:$0x3] %vm333, %v337
    %340 = vst.msk [vmem:[#allocation2 + $0x4] sm:$0x3] %vm333, %v332
    %342 = vrot.lane.b32.xlu0 %v332, 64
    %v343 = vpop.permute.xlu0 %342
    %345 = vst.msk [vmem:[#allocation2 + $0x6] sm:$0x3] %vm333, %v343
    %v346 = vld [vmem:[#allocation2] sm:$0xff]
    %v347 = vld [vmem:[#allocation8] sm:$0xff]
    %v348 = vld [vmem:[#allocation8 + $0x8] sm:$0xff]
    %v349 = vld [vmem:[#allocation8 + $0x10] sm:$0xff]
    %v350 = vld [vmem:[#allocation8 + $0x18] sm:$0xff]
    %v351 = vld [vmem:[#allocation8 + $0x20] sm:$0xff]
    %v352 = vld [vmem:[#allocation8 + $0x28] sm:$0xff]
    %v353 = vld [vmem:[#allocation8 + $0x30] sm:$0xff]
    %v354 = vld [vmem:[#allocation8 + $0x38] sm:$0xff]
    %v355 = vld [vmem:[#allocation8 + $0x40] sm:$0xff]
    %v356 = vld [vmem:[#allocation8 + $0x48] sm:$0xff]
    %v357 = vld [vmem:[#allocation8 + $0x50] sm:$0xff]
    %v358 = vld [vmem:[#allocation8 + $0x58] sm:$0xff]
    %v359 = vld [vmem:[#allocation8 + $0x60] sm:$0xff]
    %v360 = vld [vmem:[#allocation8 + $0x68] sm:$0xff]
    %v361 = vld [vmem:[#allocation8 + $0x70] sm:$0xff]
    %v362 = vld [vmem:[#allocation8 + $0x78] sm:$0xff]
    %v363 = vld [vmem:[#allocation8 + $0x80] sm:$0xff]
    %v364 = vld [vmem:[#allocation8 + $0x88] sm:$0xff]
    %v365 = vld [vmem:[#allocation8 + $0x90] sm:$0xff]
    %v366 = vld [vmem:[#allocation8 + $0x98] sm:$0xff]
    %v367 = vld [vmem:[#allocation8 + $0xa0] sm:$0xff]
    %v368 = vld [vmem:[#allocation8 + $0xa8] sm:$0xff]
    %v369 = vld [vmem:[#allocation8 + $0xb0] sm:$0xff]
    %v370 = vld [vmem:[#allocation8 + $0xb8] sm:$0xff]
    %v371 = vld [vmem:[#allocation8 + $0xc0] sm:$0xff]
    %v372 = vld [vmem:[#allocation8 + $0xc8] sm:$0xff]
    %v373 = vld [vmem:[#allocation8 + $0xd0] sm:$0xff]
    %v374 = vld [vmem:[#allocation8 + $0xd8] sm:$0xff]
    %v375 = vld [vmem:[#allocation8 + $0xe0] sm:$0xff]
    %v376 = vld [vmem:[#allocation8 + $0xe8] sm:$0xff]
    %v377 = vld [vmem:[#allocation8 + $0xf0] sm:$0xff]
    %v378 = vld [vmem:[#allocation8 + $0xf8] sm:$0xff]
    %v379 = vld [vmem:[#allocation8 + $0x100] sm:$0xff]
    %v380 = vld [vmem:[#allocation8 + $0x108] sm:$0xff]
    %v381 = vld [vmem:[#allocation8 + $0x110] sm:$0xff]
    %v382 = vld [vmem:[#allocation8 + $0x118] sm:$0xff]
    %v383 = vld [vmem:[#allocation8 + $0x120] sm:$0xff]
    %v384 = vld [vmem:[#allocation8 + $0x128] sm:$0xff]
    %v385 = vld [vmem:[#allocation8 + $0x130] sm:$0xff]
    %v386 = vld [vmem:[#allocation8 + $0x138] sm:$0xff]
    %v387 = vld [vmem:[#allocation8 + $0x140] sm:$0xff]
    %v388 = vld [vmem:[#allocation8 + $0x148] sm:$0xff]
    %v389 = vld [vmem:[#allocation8 + $0x150] sm:$0xff]
    %v390 = vld [vmem:[#allocation8 + $0x158] sm:$0xff]
    %v391 = vld [vmem:[#allocation8 + $0x160] sm:$0xff]
    %v392 = vld [vmem:[#allocation8 + $0x168] sm:$0xff]
    %v393 = vld [vmem:[#allocation8 + $0x170] sm:$0xff]
    %v394 = vld [vmem:[#allocation8 + $0x178] sm:$0xff]
    %v395 = vld [vmem:[#allocation8 + $0x180] sm:$0xff]
    %v396 = vld [vmem:[#allocation8 + $0x188] sm:$0xff]
    %v397 = vld [vmem:[#allocation8 + $0x190] sm:$0xff]
    %v398 = vld [vmem:[#allocation8 + $0x198] sm:$0xff]
    %v399 = vld [vmem:[#allocation8 + $0x1a0] sm:$0xff]
    %v400 = vld [vmem:[#allocation8 + $0x1a8] sm:$0xff]
    %v401 = vld [vmem:[#allocation8 + $0x1b0] sm:$0xff]
    %v402 = vld [vmem:[#allocation8 + $0x1b8] sm:$0xff]
    %v403 = vld [vmem:[#allocation8 + $0x1c0] sm:$0xff]
    %v404 = vld [vmem:[#allocation8 + $0x1c8] sm:$0xff]
    %v405 = vld [vmem:[#allocation8 + $0x1d0] sm:$0xff]
    %v406 = vld [vmem:[#allocation8 + $0x1d8] sm:$0xff]
    %v407 = vld [vmem:[#allocation8 + $0x1e0] sm:$0xff]
    %v408 = vld [vmem:[#allocation8 + $0x1e8] sm:$0xff]
    %v409 = vld [vmem:[#allocation8 + $0x1f0] sm:$0xff]
    %v410 = vld [vmem:[#allocation8 + $0x1f8] sm:$0xff]
    %v411 = vld [vmem:[#allocation8 + $0x200] sm:$0xff]
    %v412 = vld [vmem:[#allocation8 + $0x208] sm:$0xff]
    %v413 = vld [vmem:[#allocation8 + $0x210] sm:$0xff]
    %v414 = vld [vmem:[#allocation8 + $0x218] sm:$0xff]
    %v415 = vld [vmem:[#allocation8 + $0x220] sm:$0xff]
    %v416 = vld [vmem:[#allocation8 + $0x228] sm:$0xff]
    %v417 = vld [vmem:[#allocation8 + $0x230] sm:$0xff]
    %v418 = vld [vmem:[#allocation8 + $0x238] sm:$0xff]
    %v419 = vld [vmem:[%s3] sm:$0xff]
    %v420 = vld [vmem:[%s3 + $0x8] sm:$0x1]
    %v423 = vlaneseq
    %v424 = vshrl.u32 %v423, 7
    %v425 = vsub.s32 0, %v424
    %v426 = vrot.slane %v419, %v425
    %v427 = vlaneseq
    %v428 = vshrl.u32 %v427, 7
    %v429 = vsub.s32 1, %v428
    %v430 = vrot.slane %v419, %v429
    %v431 = vlaneseq
    %v432 = vshrl.u32 %v431, 7
    %v433 = vsub.s32 2, %v432
    %v434 = vrot.slane %v419, %v433
    %v435 = vlaneseq
    %v436 = vshrl.u32 %v435, 7
    %v437 = vsub.s32 3, %v436
    %v438 = vrot.slane %v419, %v437
    %v439 = vlaneseq
    %v440 = vshrl.u32 %v439, 7
    %v441 = vsub.s32 4, %v440
    %v442 = vrot.slane %v419, %v441
    %v443 = vlaneseq
    %v444 = vshrl.u32 %v443, 7
    %v445 = vsub.s32 5, %v444
    %v446 = vrot.slane %v419, %v445
    %v447 = vlaneseq
    %v448 = vshrl.u32 %v447, 7
    %v449 = vsub.s32 6, %v448
    %v450 = vrot.slane %v419, %v449
    %v451 = vlaneseq
    %v452 = vshrl.u32 %v451, 7
    %v453 = vsub.s32 7, %v452
    %v454 = vrot.slane %v419, %v453
    %v455 = vlaneseq
    %v456 = vshrl.u32 %v455, 7
    %v457 = vsub.s32 0, %v456
    %v458 = vrot.slane %v420, %v457
    %vm468 = vcmask 523264
    %v470 = vsel %vm468, %v346, 0
    %472 = vmatprep.subr.mxu0 %v348
    %473 = vmatpush1.msra.mxu0 %v347
    %474 = vmatprep.subr.mxu0 %v357
    %475 = vmatpush1.msra.mxu0 %v356
    %476 = vmatprep.subr.mxu0 %v366
    %477 = vmatpush1.msra.mxu0 %v365
    %478 = vmatprep.subr.mxu0 %v375
    %479 = vmatpush1.msra.mxu0 %v374
    %480 = vmatprep.subr.mxu0 %v384
    %481 = vmatpush1.msra.mxu0 %v383
    %482 = vmatprep.subr.mxu0 %v393
    %483 = vmatpush1.msra.mxu0 %v392
    %484 = vmatprep.subr.mxu0 %v402
    %485 = vmatpush1.msra.mxu0 %v401
    %486 = vmatprep.subr.mxu0 %v411
    %487 = vmatpush1.msra.mxu0 %v410
    %488 = vmatprep.subr.mxu0 0.0
    %489 = vmatpush1.msra.mxu0 0.0
    %490 = vmatprep.subr.mxu0 0.0
    %491 = vmatpush1.msra.mxu0 0.0
    %492 = vmatprep.subr.mxu0 0.0
    %493 = vmatpush1.msra.mxu0 0.0
    %494 = vmatprep.subr.mxu0 0.0
    %495 = vmatpush1.msra.mxu0 0.0
    %496 = vmatprep.subr.mxu0 0.0
    %497 = vmatpush1.msra.mxu0 0.0
    %498 = vmatprep.subr.mxu0 0.0
    %499 = vmatpush1.msra.mxu0 0.0
    %500 = vmatprep.subr.mxu0 0.0
    %501 = vmatpush1.msra.mxu0 0.0
    %502 = vmatprep.subr.mxu0 0.0
    %503 = vmatpush1.msra.mxu0 0.0
    %504 = vmatprep.subr.mxu0 0.0
    %505 = vmatpush1.msra.mxu0 0.0
    %506 = vmatprep.subr.mxu0 0.0
    %507 = vmatpush1.msra.mxu0 0.0
    %508 = vmatprep.subr.mxu0 0.0
    %509 = vmatpush1.msra.mxu0 0.0
    %510 = vmatprep.subr.mxu0 0.0
    %511 = vmatpush1.msra.mxu0 0.0
    %512 = vmatprep.subr.mxu0 0.0
    %513 = vmatpush1.msra.mxu0 0.0
    %514 = vmatprep.subr.mxu0 0.0
    %515 = vmatpush1.msra.mxu0 0.0
    %516 = vmatprep.subr.mxu0 0.0
    %517 = vmatpush1.msra.mxu0 0.0
    %518 = vmatprep.subr.mxu0 0.0
    %519 = vmatpush1.msra.mxu0 0.0
    %520 = vmatprep.subr.mxu0 0.0
    %521 = vmatpush1.msra.mxu0 0.0
    %522 = vmatprep.subr.mxu0 0.0
    %523 = vmatpush1.msra.mxu0 0.0
    %524 = vmatprep.subr.mxu0 0.0
    %525 = vmatpush1.msra.mxu0 0.0
    %526 = vmatprep.subr.mxu0 0.0
    %527 = vmatpush1.msra.mxu0 0.0
    %528 = vmatprep.subr.mxu0 0.0
    %529 = vmatpush1.msra.mxu0 0.0
    %530 = vmatprep.subr.mxu0 0.0
    %531 = vmatpush1.msra.mxu0 0.0
    %532 = vmatprep.subr.mxu0 0.0
    %533 = vmatpush1.msra.mxu0 0.0
    %534 = vmatprep.subr.mxu0 0.0
    %535 = vmatpush1.msra.mxu0 0.0
    %536 = vmatprep.mubr.f32.mxu0 0.0
    %537 = vmatmul.mubr.f32.gmra.mrb[0].mxu0 %v470
    %v538 = vpop.f32.mrb[0].mxu0
    %v539 = vadd.f32 %v426, %v538
    %v540 = vpop.f32.mrb[0].mxu0
    %v541 = vadd.f32 %v430, %v540
    %542 = vdwg.mxu0
    %543 = vmatprep.subr.mxu0 %v350
    %544 = vmatpush1.msra.mxu0 %v349
    %545 = vmatprep.subr.mxu0 %v359
    %546 = vmatpush1.msra.mxu0 %v358
    %547 = vmatprep.subr.mxu0 %v368
    %548 = vmatpush1.msra.mxu0 %v367
    %549 = vmatprep.subr.mxu0 %v377
    %550 = vmatpush1.msra.mxu0 %v376
    %551 = vmatprep.subr.mxu0 %v386
    %552 = vmatpush1.msra.mxu0 %v385
    %553 = vmatprep.subr.mxu0 %v395
    %554 = vmatpush1.msra.mxu0 %v394
    %555 = vmatprep.subr.mxu0 %v404
    %556 = vmatpush1.msra.mxu0 %v403
    %557 = vmatprep.subr.mxu0 %v413
    %558 = vmatpush1.msra.mxu0 %v412
    %559 = vmatprep.subr.mxu0 0.0
    %560 = vmatpush1.msra.mxu0 0.0
    %561 = vmatprep.subr.mxu0 0.0
    %562 = vmatpush1.msra.mxu0 0.0
    %563 = vmatprep.subr.mxu0 0.0
    %564 = vmatpush1.msra.mxu0 0.0
    %565 = vmatprep.subr.mxu0 0.0
    %566 = vmatpush1.msra.mxu0 0.0
    %567 = vmatprep.subr.mxu0 0.0
    %568 = vmatpush1.msra.mxu0 0.0
    %569 = vmatprep.subr.mxu0 0.0
    %570 = vmatpush1.msra.mxu0 0.0
    %571 = vmatprep.subr.mxu0 0.0
    %572 = vmatpush1.msra.mxu0 0.0
    %573 = vmatprep.subr.mxu0 0.0
    %574 = vmatpush1.msra.mxu0 0.0
    %575 = vmatprep.subr.mxu0 0.0
    %576 = vmatpush1.msra.mxu0 0.0
    %577 = vmatprep.subr.mxu0 0.0
    %578 = vmatpush1.msra.mxu0 0.0
    %579 = vmatprep.subr.mxu0 0.0
    %580 = vmatpush1.msra.mxu0 0.0
    %581 = vmatprep.subr.mxu0 0.0
    %582 = vmatpush1.msra.mxu0 0.0
    %583 = vmatprep.subr.mxu0 0.0
    %584 = vmatpush1.msra.mxu0 0.0
    %585 = vmatprep.subr.mxu0 0.0
    %586 = vmatpush1.msra.mxu0 0.0
    %587 = vmatprep.subr.mxu0 0.0
    %588 = vmatpush1.msra.mxu0 0.0
    %589 = vmatprep.subr.mxu0 0.0
    %590 = vmatpush1.msra.mxu0 0.0
    %591 = vmatprep.subr.mxu0 0.0
    %592 = vmatpush1.msra.mxu0 0.0
    %593 = vmatprep.subr.mxu0 0.0
    %594 = vmatpush1.msra.mxu0 0.0
    %595 = vmatprep.subr.mxu0 0.0
    %596 = vmatpush1.msra.mxu0 0.0
    %597 = vmatprep.subr.mxu0 0.0
    %598 = vmatpush1.msra.mxu0 0.0
    %599 = vmatprep.subr.mxu0 0.0
    %600 = vmatpush1.msra.mxu0 0.0
    %601 = vmatprep.subr.mxu0 0.0
    %602 = vmatpush1.msra.mxu0 0.0
    %603 = vmatprep.subr.mxu0 0.0
    %604 = vmatpush1.msra.mxu0 0.0
    %605 = vmatprep.subr.mxu0 0.0
    %606 = vmatpush1.msra.mxu0 0.0
    %607 = vmatprep.mubr.f32.mxu0 0.0
    %608 = vmatmul.mubr.f32.gmra.mrb[0].mxu0 %v470
    %v609 = vpop.f32.mrb[0].mxu0
    %v610 = vadd.f32 %v434, %v609
    %v611 = vpop.f32.mrb[0].mxu0
    %v612 = vadd.f32 %v438, %v611
    %613 = vdwg.mxu0
    %614 = vmatprep.subr.mxu0 %v352
    %615 = vmatpush1.msra.mxu0 %v351
    %616 = vmatprep.subr.mxu0 %v361
    %617 = vmatpush1.msra.mxu0 %v360
    %618 = vmatprep.subr.mxu0 %v370
    %619 = vmatpush1.msra.mxu0 %v369
    %620 = vmatprep.subr.mxu0 %v379
    %621 = vmatpush1.msra.mxu0 %v378
    %622 = vmatprep.subr.mxu0 %v388
    %623 = vmatpush1.msra.mxu0 %v387
    %624 = vmatprep.subr.mxu0 %v397
    %625 = vmatpush1.msra.mxu0 %v396
    %626 = vmatprep.subr.mxu0 %v406
    %627 = vmatpush1.msra.mxu0 %v405
    %628 = vmatprep.subr.mxu0 %v415
    %629 = vmatpush1.msra.mxu0 %v414
    %630 = vmatprep.subr.mxu0 0.0
    %631 = vmatpush1.msra.mxu0 0.0
    %632 = vmatprep.subr.mxu0 0.0
    %633 = vmatpush1.msra.mxu0 0.0
    %634 = vmatprep.subr.mxu0 0.0
    %635 = vmatpush1.msra.mxu0 0.0
    %636 = vmatprep.subr.mxu0 0.0
    %637 = vmatpush1.msra.mxu0 0.0
    %638 = vmatprep.subr.mxu0 0.0
    %639 = vmatpush1.msra.mxu0 0.0
    %640 = vmatprep.subr.mxu0 0.0
    %641 = vmatpush1.msra.mxu0 0.0
    %642 = vmatprep.subr.mxu0 0.0
    %643 = vmatpush1.msra.mxu0 0.0
    %644 = vmatprep.subr.mxu0 0.0
    %645 = vmatpush1.msra.mxu0 0.0
    %646 = vmatprep.subr.mxu0 0.0
    %647 = vmatpush1.msra.mxu0 0.0
    %648 = vmatprep.subr.mxu0 0.0
    %649 = vmatpush1.msra.mxu0 0.0
    %650 = vmatprep.subr.mxu0 0.0
    %651 = vmatpush1.msra.mxu0 0.0
    %652 = vmatprep.subr.mxu0 0.0
    %653 = vmatpush1.msra.mxu0 0.0
    %654 = vmatprep.subr.mxu0 0.0
    %655 = vmatpush1.msra.mxu0 0.0
    %656 = vmatprep.subr.mxu0 0.0
    %657 = vmatpush1.msra.mxu0 0.0
    %658 = vmatprep.subr.mxu0 0.0
    %659 = vmatpush1.msra.mxu0 0.0
    %660 = vmatprep.subr.mxu0 0.0
    %661 = vmatpush1.msra.mxu0 0.0
    %662 = vmatprep.subr.mxu0 0.0
    %663 = vmatpush1.msra.mxu0 0.0
    %664 = vmatprep.subr.mxu0 0.0
    %665 = vmatpush1.msra.mxu0 0.0
    %666 = vmatprep.subr.mxu0 0.0
    %667 = vmatpush1.msra.mxu0 0.0
    %668 = vmatprep.subr.mxu0 0.0
    %669 = vmatpush1.msra.mxu0 0.0
    %670 = vmatprep.subr.mxu0 0.0
    %671 = vmatpush1.msra.mxu0 0.0
    %672 = vmatprep.subr.mxu0 0.0
    %673 = vmatpush1.msra.mxu0 0.0
    %674 = vmatprep.subr.mxu0 0.0
    %675 = vmatpush1.msra.mxu0 0.0
    %676 = vmatprep.subr.mxu0 0.0
    %677 = vmatpush1.msra.mxu0 0.0
    %678 = vmatprep.mubr.f32.mxu0 0.0
    %679 = vmatmul.mubr.f32.gmra.mrb[0].mxu0 %v470
    %v680 = vpop.f32.mrb[0].mxu0
    %v681 = vadd.f32 %v442, %v680
    %v682 = vpop.f32.mrb[0].mxu0
    %v683 = vadd.f32 %v446, %v682
    %684 = vdwg.mxu0
    %685 = vmatprep.subr.mxu0 %v354
    %686 = vmatpush1.msra.mxu0 %v353
    %687 = vmatprep.subr.mxu0 %v363
    %688 = vmatpush1.msra.mxu0 %v362
    %689 = vmatprep.subr.mxu0 %v372
    %690 = vmatpush1.msra.mxu0 %v371
    %691 = vmatprep.subr.mxu0 %v381
    %692 = vmatpush1.msra.mxu0 %v380
    %693 = vmatprep.subr.mxu0 %v390
    %694 = vmatpush1.msra.mxu0 %v389
    %695 = vmatprep.subr.mxu0 %v399
    %696 = vmatpush1.msra.mxu0 %v398
    %697 = vmatprep.subr.mxu0 %v408
    %698 = vmatpush1.msra.mxu0 %v407
    %699 = vmatprep.subr.mxu0 %v417
    %700 = vmatpush1.msra.mxu0 %v416
    %701 = vmatprep.subr.mxu0 0.0
    %702 = vmatpush1.msra.mxu0 0.0
    %703 = vmatprep.subr.mxu0 0.0
    %704 = vmatpush1.msra.mxu0 0.0
    %705 = vmatprep.subr.mxu0 0.0
    %706 = vmatpush1.msra.mxu0 0.0
    %707 = vmatprep.subr.mxu0 0.0
    %708 = vmatpush1.msra.mxu0 0.0
    %709 = vmatprep.subr.mxu0 0.0
    %710 = vmatpush1.msra.mxu0 0.0
    %711 = vmatprep.subr.mxu0 0.0
    %712 = vmatpush1.msra.mxu0 0.0
    %713 = vmatprep.subr.mxu0 0.0
    %714 = vmatpush1.msra.mxu0 0.0
    %715 = vmatprep.subr.mxu0 0.0
    %716 = vmatpush1.msra.mxu0 0.0
    %717 = vmatprep.subr.mxu0 0.0
    %718 = vmatpush1.msra.mxu0 0.0
    %719 = vmatprep.subr.mxu0 0.0
    %720 = vmatpush1.msra.mxu0 0.0
    %721 = vmatprep.subr.mxu0 0.0
    %722 = vmatpush1.msra.mxu0 0.0
    %723 = vmatprep.subr.mxu0 0.0
    %724 = vmatpush1.msra.mxu0 0.0
    %725 = vmatprep.subr.mxu0 0.0
    %726 = vmatpush1.msra.mxu0 0.0
    %727 = vmatprep.subr.mxu0 0.0
    %728 = vmatpush1.msra.mxu0 0.0
    %729 = vmatprep.subr.mxu0 0.0
    %730 = vmatpush1.msra.mxu0 0.0
    %731 = vmatprep.subr.mxu0 0.0
    %732 = vmatpush1.msra.mxu0 0.0
    %733 = vmatprep.subr.mxu0 0.0
    %734 = vmatpush1.msra.mxu0 0.0
    %735 = vmatprep.subr.mxu0 0.0
    %736 = vmatpush1.msra.mxu0 0.0
    %737 = vmatprep.subr.mxu0 0.0
    %738 = vmatpush1.msra.mxu0 0.0
    %739 = vmatprep.subr.mxu0 0.0
    %740 = vmatpush1.msra.mxu0 0.0
    %741 = vmatprep.subr.mxu0 0.0
    %742 = vmatpush1.msra.mxu0 0.0
    %743 = vmatprep.subr.mxu0 0.0
    %744 = vmatpush1.msra.mxu0 0.0
    %745 = vmatprep.subr.mxu0 0.0
    %746 = vmatpush1.msra.mxu0 0.0
    %747 = vmatprep.subr.mxu0 0.0
    %748 = vmatpush1.msra.mxu0 0.0
    %749 = vmatprep.mubr.f32.mxu0 0.0
    %750 = vmatmul.mubr.f32.gmra.mrb[0].mxu0 %v470
    %v751 = vpop.f32.mrb[0].mxu0
    %v752 = vadd.f32 %v450, %v751
    %v753 = vpop.f32.mrb[0].mxu0
    %v754 = vadd.f32 %v454, %v753
    %755 = vdwg.mxu0
    %756 = vmatprep.subr.mxu0 0.0
    %757 = vmatpush1.msra.mxu0 %v355
    %758 = vmatprep.subr.mxu0 0.0
    %759 = vmatpush1.msra.mxu0 %v364
    %760 = vmatprep.subr.mxu0 0.0
    %761 = vmatpush1.msra.mxu0 %v373
    %762 = vmatprep.subr.mxu0 0.0
    %763 = vmatpush1.msra.mxu0 %v382
    %764 = vmatprep.subr.mxu0 0.0
    %765 = vmatpush1.msra.mxu0 %v391
    %766 = vmatprep.subr.mxu0 0.0
    %767 = vmatpush1.msra.mxu0 %v400
    %768 = vmatprep.subr.mxu0 0.0
    %769 = vmatpush1.msra.mxu0 %v409
    %770 = vmatprep.subr.mxu0 0.0
    %771 = vmatpush1.msra.mxu0 %v418
    %772 = vmatprep.subr.mxu0 0.0
    %773 = vmatpush1.msra.mxu0 0.0
    %774 = vmatprep.subr.mxu0 0.0
    %775 = vmatpush1.msra.mxu0 0.0
    %776 = vmatprep.subr.mxu0 0.0
    %777 = vmatpush1.msra.mxu0 0.0
    %778 = vmatprep.subr.mxu0 0.0
    %779 = vmatpush1.msra.mxu0 0.0
    %780 = vmatprep.subr.mxu0 0.0
    %781 = vmatpush1.msra.mxu0 0.0
    %782 = vmatprep.subr.mxu0 0.0
    %783 = vmatpush1.msra.mxu0 0.0
    %784 = vmatprep.subr.mxu0 0.0
    %785 = vmatpush1.msra.mxu0 0.0
    %786 = vmatprep.subr.mxu0 0.0
    %787 = vmatpush1.msra.mxu0 0.0
    %788 = vmatprep.subr.mxu0 0.0
    %789 = vmatpush1.msra.mxu0 0.0
    %790 = vmatprep.subr.mxu0 0.0
    %791 = vmatpush1.msra.mxu0 0.0
    %792 = vmatprep.subr.mxu0 0.0
    %793 = vmatpush1.msra.mxu0 0.0
    %794 = vmatprep.subr.mxu0 0.0
    %795 = vmatpush1.msra.mxu0 0.0
    %796 = vmatprep.subr.mxu0 0.0
    %797 = vmatpush1.msra.mxu0 0.0
    %798 = vmatprep.subr.mxu0 0.0
    %799 = vmatpush1.msra.mxu0 0.0
    %800 = vmatprep.subr.mxu0 0.0
    %801 = vmatpush1.msra.mxu0 0.0
    %802 = vmatprep.subr.mxu0 0.0
    %803 = vmatpush1.msra.mxu0 0.0
    %804 = vmatprep.subr.mxu0 0.0
    %805 = vmatpush1.msra.mxu0 0.0
    %806 = vmatprep.subr.mxu0 0.0
    %807 = vmatpush1.msra.mxu0 0.0
    %808 = vmatprep.subr.mxu0 0.0
    %809 = vmatpush1.msra.mxu0 0.0
    %810 = vmatprep.subr.mxu0 0.0
    %811 = vmatpush1.msra.mxu0 0.0
    %812 = vmatprep.subr.mxu0 0.0
    %813 = vmatpush1.msra.mxu0 0.0
    %814 = vmatprep.subr.mxu0 0.0
    %815 = vmatpush1.msra.mxu0 0.0
    %816 = vmatprep.subr.mxu0 0.0
    %817 = vmatpush1.msra.mxu0 0.0
    %818 = vmatprep.subr.mxu0 0.0
    %819 = vmatpush1.msra.mxu0 0.0
    %820 = vmatprep.mubr.f32.mxu0 0.0
    %821 = vmatmul.mubr.f32.gmra.mrb[0].mxu0 %v470
    %v822 = vpop.f32.mrb[0].mxu0
    %v823 = vadd.f32 %v458, %v822
    %v824 = vpop.f32.mrb[0].mxu0
    %825 = vdwg.mxu0
    %826 = vst [vmem:[#allocation9] sm:$0xff] %v539
    %827 = vst [vmem:[#allocation9 + $0x8] sm:$0xff] %v541
    %828 = vst [vmem:[#allocation9 + $0x10] sm:$0xff] %v610
    %829 = vst [vmem:[#allocation9 + $0x18] sm:$0xff] %v612
    %830 = vst [vmem:[#allocation9 + $0x20] sm:$0xff] %v681
    %831 = vst [vmem:[#allocation9 + $0x28] sm:$0xff] %v683
    %832 = vst [vmem:[#allocation9 + $0x30] sm:$0xff] %v752
    %833 = vst [vmem:[#allocation9 + $0x38] sm:$0xff] %v754
    %834 = vst [vmem:[#allocation9 + $0x40] sm:$0xff] %v823
    // Predicated region
    $region30: #{tpu_custom_call.1} parent=1 // pred_check
      _
    $region31: #{tpu_custom_call.1} parent=1 // pred_check_branch
      %836 = sbr.rel (0) target = $region33
    $region32: #{tpu_custom_call.1} parent=1 // pred_region
      %s838 = ssub.s32 1152, 1152
      %839 = vsyncadd [#allocation5], %s838
      %s841 = sshll.u32 [#allocation9], 4
      %s842 = int_to_ptr.vmem [resolvable:$true] %s841
      %844 = dma.vmem_to_hbm [thread:$0]  %s842, 1152, %s4, [#allocation5]
    $region33: #{tpu_custom_call.1} parent=1 // pred_fallthru
      _
    // Predicated region
    $region34: #{tpu_custom_call.1} parent=1 // pred_check
      _
    $region35: #{tpu_custom_call.1} parent=1 // pred_check_branch
      %846 = sbr.rel (0) target = $region37
    $region36: #{tpu_custom_call.1} parent=1 // pred_region
      %847 = dma.done [#allocation5], 1152
    $region37: #{tpu_custom_call.1} parent=1 // pred_fallthru
      _
    %848 = vsyncpa [#allocation4], 1
    %849 = vsyncpa [#allocation7], 1
    %850 = vsyncpa [#allocation5], 1

</llo_original>
